<compile_context>
chip_gen: v6e
topology: v6e:2x2x1
jax: 0.10.0
libtpu: 0.0.40
codegen_flags: <defaults>
</compile_context>

<pallas_src>
import functools

import jax
import jax.numpy as jnp
from jax.experimental import pallas as pl
from jax.experimental.pallas import tpu as pltpu


def _gdice_kernel(x_ref, t_ref, inter_ref, psum_ref, tsum_ref,
                  *, hw, tm, n_classes, dense_target):
    """One (image n, spatial tile i) step: channel softmax + per-class partial
    sums over the lane (spatial) axis, written to this step's output slot."""
    i = pl.program_id(1)

    x = x_ref[0].astype(jnp.float32)                       # (C, TM), upcast in VMEM

    # Softmax over the channel axis (dim=1 of the original NCHW tensor).
    m = jnp.max(x, axis=0, keepdims=True)                  # (1, TM)
    e = jnp.exp(x - m)                                     # (C, TM)  (EUP)
    denom = jnp.sum(e, axis=0, keepdims=True)              # (1, TM)
    # One reciprocal per column instead of C divides per column.
    p = e * pl.reciprocal(denom, approx=False)             # (C, TM)

    needs_mask = (hw % tm) != 0                            # static Python bool
    if needs_mask:
        # Only the last spatial tile is partial; on interior tiles limit >= tm
        # so the select keeps everything.  Must be a select (not a multiply):
        # OOB columns of a partial block hold garbage and exp(garbage) can be
        # NaN/Inf, which would survive `* 0.0`.
        limit = hw - i * tm                                # scalar int32
        col = jax.lax.broadcasted_iota(jnp.int32, (1, tm), 1)
        valid = col < limit                                # (1, TM) bool
        p = jnp.where(valid, p, 0.0)

    if dense_target:
        t = t_ref[0].astype(jnp.float32)                   # (C, TM)
        if needs_mask:
            t = jnp.where(valid, t, 0.0)
        inter = jnp.sum(p * t, axis=1, keepdims=True)      # (C, 1)
        tsum = jnp.sum(t, axis=1, keepdims=True)           # (C, 1)
    else:
        labels = t_ref[0]                                  # (1, TM) int32
        if needs_mask:
            labels = jnp.where(valid, labels, -1)          # OOB labels match no class
        cls = jax.lax.broadcasted_iota(jnp.int32, (n_classes, tm), 0)
        onehot = labels == cls                             # (C, TM) bool, built in VMEM
        inter = jnp.sum(jnp.where(onehot, p, 0.0), axis=1, keepdims=True)
        tsum = jnp.sum(onehot.astype(jnp.float32), axis=1, keepdims=True)

    psum = jnp.sum(p, axis=1, keepdims=True)               # (C, 1)

    inter_ref[0, 0] = inter
    psum_ref[0, 0] = psum
    tsum_ref[0, 0] = tsum


def _vmem_capacity_bytes():
    """Per-TensorCore VMEM; the 64 MiB fallback is safe on every generation."""
    try:
        cap = int(getattr(pltpu.get_tpu_info(), "vmem_capacity_bytes", 0))
        if cap > 0:
            return cap
    except Exception:
        pass
    return 64 * 1024 * 1024


def _choose_tm(hw, c, x_itemsize, t_itemsize, dense_target, vmem_cap):
    """Largest lane tile (multiple of 128) whose double-buffered input tiles
    plus f32 in-kernel temporaries fit a generation-aware VMEM budget."""
    if hw <= 128:
        return hw                                 # single full-extent block

    def padded_rows(rows, itemsize):
        sub = max(8, 32 // max(itemsize, 1))      # sublane tile: f32->8, bf16->16, i8->32
        return -(-rows // sub) * sub

    per_col = 2 * padded_rows(c, x_itemsize) * x_itemsize        # x, 2 pipeline bufs
    if dense_target:
        per_col += 2 * padded_rows(c, t_itemsize) * t_itemsize   # dense target, 2 bufs
    else:
        per_col += 2 * padded_rows(1, 4) * 4                     # (1, TM) int32 labels
    per_col += 6 * padded_rows(c, 4) * 4                         # f32 temporaries (x, e, p, t, ...)

    budget = int(0.40 * vmem_cap)                 # headroom under vmem_limit_bytes
    tm = (budget // per_col) // 128 * 128
    tm = max(128, min(tm, 128 * 1024))            # >= ~1-2 MiB/step for small C
    return min(tm, hw // 128 * 128)               # keep blocks inside the array


def gdice_loss_v2(net_output, gt, smooth=1e-5):
    """Generalized Dice Loss V2 forward.

    net_output: (N, C, *spatial) logits (any float dtype).
    gt: integer class labels of shape (N, *spatial) / (N, 1, *spatial), or a
        dense target with the same shape as net_output (soft / one-hot labels).
    Returns scalar float32 loss.
    """
    shp_x = net_output.shape
    N, C = int(shp_x[0]), int(shp_x[1])
    HW = 1
    for d in shp_x[2:]:
        HW *= int(d)

    x = net_output.reshape(N, C, HW)              # free reshape, native layout

    if gt.ndim != net_output.ndim:
        gt = gt.reshape((gt.shape[0], 1) + gt.shape[1:])
    dense_target = tuple(gt.shape) == tuple(shp_x)

    t_itemsize = gt.dtype.itemsize if dense_target else 4
    vmem_cap = _vmem_capacity_bytes()
    TM = _choose_tm(HW, C, net_output.dtype.itemsize, t_itemsize,
                    dense_target, vmem_cap)
    num_tiles = -(-HW // TM)

    if dense_target:
        # Streamed at the caller's dtype (bf16 / int8 one-hot stay narrow in
        # HBM) and upcast per tile in VMEM inside the kernel.
        t = gt.reshape(N, C, HW)
        t_spec = pl.BlockSpec((1, C, TM), lambda n, i: (n, 0, i))
    else:
        t = gt.reshape(N, 1, HW).astype(jnp.int32)
        t_spec = pl.BlockSpec((1, 1, TM), lambda n, i: (n, 0, i))

    kernel = functools.partial(
        _gdice_kernel, hw=int(HW), tm=int(TM), n_classes=C,
        dense_target=bool(dense_target))

    part_shape = jax.ShapeDtypeStruct((N, num_tiles, C, 1), jnp.float32)
    part_spec = pl.BlockSpec((1, 1, C, 1), lambda n, i: (n, i, 0, 0))

    inter_p, psum_p, tsum_p = pl.pallas_call(
        kernel,
        out_shape=(part_shape, part_shape, part_shape),
        grid_spec=pltpu.PrefetchScalarGridSpec(
            num_scalar_prefetch=0,
            grid=(N, num_tiles),
            in_specs=[pl.BlockSpec((1, C, TM), lambda n, i: (n, 0, i)), t_spec],
            out_specs=(part_spec, part_spec, part_spec),
        ),
        compiler_params=pltpu.CompilerParams(
            # Every (n, tile) step writes its own disjoint partial-sum slot, so
            # both grid axes are parallel (v7x can shard across its 2 TCs; a
            # no-op on single-TC v5e/v6e).
            dimension_semantics=("parallel", "parallel"),
            vmem_limit_bytes=min(int(0.70 * vmem_cap), 100 * 1024 * 1024),
        ),
    )(x, t)

    # Tiny finalize (O(N * num_tiles * C) floats) in plain JAX.
    inter_c = jnp.sum(inter_p, axis=(0, 1, 3))    # (C,)
    psum_c = jnp.sum(psum_p, axis=(0, 1, 3))      # (C,)  sum of softmax probs
    tsum_c = jnp.sum(tsum_p, axis=(0, 1, 3))      # (C,)  target_sum
    w = 1.0 / jnp.maximum(tsum_c * tsum_c, smooth)
    intersect = jnp.sum(inter_c * w)
    # (input + target).sum(-1) == psum_c + tsum_c  (the p+t add is folded here)
    denominator = jnp.maximum(jnp.sum((psum_c + tsum_c) * w), smooth)
    return 1.0 - 2.0 * intersect / denominator


def _reference_jax(net_output, gt, smooth=1e-5):
    """Pure-JAX reference mirroring the PyTorch module, for sanity checks."""
    shp_x = net_output.shape
    if gt.ndim != net_output.ndim:
        gt = gt.reshape((gt.shape[0], 1) + gt.shape[1:])
    if tuple(gt.shape) == tuple(shp_x):
        y_onehot = gt.astype(jnp.float32)
    else:
        labels = gt.astype(jnp.int32)[:, 0]
        oh = jax.nn.one_hot(labels, shp_x[1], dtype=jnp.float32)
        y_onehot = jnp.moveaxis(oh, -1, 1)
    sm = jax.nn.softmax(net_output.astype(jnp.float32), axis=1)
    C = shp_x[1]
    order = (1, 0) + tuple(range(2, sm.ndim))
    inp = jnp.transpose(sm, order).reshape(C, -1)
    tgt = jnp.transpose(y_onehot, order).reshape(C, -1)
    tsum = tgt.sum(-1)
    w = 1.0 / jnp.maximum(tsum * tsum, smooth)
    intersect = ((inp * tgt).sum(-1) * w).sum()
    denominator = jnp.maximum(((inp + tgt).sum(-1) * w).sum(), smooth)
    return 1.0 - 2.0 * intersect / denominator


if __name__ == "__main__":
    key = jax.random.PRNGKey(0)
    k1, k2, k3, k4 = jax.random.split(key, 4)

    # 1) integer-label path, HW a multiple of the tile
    N, C, H, W = 2, 4, 16, 16
    net_output = jax.random.normal(k1, (N, C, H, W), dtype=jnp.float32)
    gt = jax.random.randint(k2, (N, H, W), 0, C, dtype=jnp.int32)
    loss = jax.block_until_ready(gdice_loss_v2(net_output, gt))
    ref = _reference_jax(net_output, gt)
    assert jnp.allclose(loss, ref, atol=1e-5, rtol=1e-5), (loss, ref)

    # 2) dense (one-hot / soft-label) target path
    gt_dense = jnp.moveaxis(jax.nn.one_hot(gt, C, dtype=jnp.float32), -1, 1)
    loss_d = jax.block_until_ready(gdice_loss_v2(net_output, gt_dense))
    assert jnp.allclose(loss_d, ref, atol=1e-5, rtol=1e-5), (loss_d, ref)

    # 3) ragged spatial size (exercises the in-kernel partial-tile where-mask)
    net2 = jax.random.normal(k3, (2, 4, 15, 15), dtype=jnp.float32)
    gt2 = jax.random.randint(k4, (2, 15, 15), 0, 4, dtype=jnp.int32)
    loss2 = jax.block_until_ready(gdice_loss_v2(net2, gt2))
    ref2 = _reference_jax(net2, gt2)
    assert jnp.allclose(loss2, ref2, atol=1e-5, rtol=1e-5), (loss2, ref2)

    # 4) bf16 logits stream at 2 B/elem and are upcast per tile in VMEM
    net3 = net_output.astype(jnp.bfloat16)
    loss3 = jax.block_until_ready(gdice_loss_v2(net3, gt))
    ref3 = _reference_jax(net3, gt)
    assert jnp.allclose(loss3, ref3, atol=1e-5, rtol=1e-5), (loss3, ref3)

    print("KERNEL_OK")
</pallas_src>

<mosaic_0001>
module attributes {stable_mosaic.version = 11 : i64} {
  func.func @_gdice_kernel(%arg0: i32, %arg1: i32, %arg2: memref<1x4x256xf32, #tpu.memory_space<vmem>>, %arg3: memref<1x1x256xi32, #tpu.memory_space<vmem>>, %arg4: memref<1x1x4x1xf32, #tpu.memory_space<vmem>>, %arg5: memref<1x1x4x1xf32, #tpu.memory_space<vmem>>, %arg6: memref<1x1x4x1xf32, #tpu.memory_space<vmem>>) attributes {dimension_semantics = [#tpu.dimension_semantics<parallel>, #tpu.dimension_semantics<parallel>], iteration_bounds = array<i64: 2, 1>, scalar_prefetch = 0 : i64, scratch_operands = 0 : i64, tpu.core_type = #tpu.core_type<tc>, window_params = [{transform_indices = @transform_0, window_bounds = array<i64: 1, 4, 256>}, {transform_indices = @transform_1, window_bounds = array<i64: 1, 1, 256>}, {transform_indices = @transform_2, window_bounds = array<i64: 1, 1, 4, 1>}, {transform_indices = @transform_3, window_bounds = array<i64: 1, 1, 4, 1>}, {transform_indices = @transform_4, window_bounds = array<i64: 1, 1, 4, 1>}]} {
    %c0 = arith.constant 0 : index
    %c0_0 = arith.constant 0 : index
    %c0_1 = arith.constant 0 : index
    %0 = vector.load %arg2[%c0, %c0_0, %c0_1] : memref<1x4x256xf32, #tpu.memory_space<vmem>>, vector<1x4x256xf32>
    %1 = vector.shape_cast %0 : vector<1x4x256xf32> to vector<4x256xf32>
    %cst = arith.constant dense<0xFF800000> : vector<256xf32>
    %2 = vector.multi_reduction <maximumf>, %1, %cst [0] : vector<4x256xf32> to vector<256xf32>
    %3 = vector.shape_cast %2 : vector<256xf32> to vector<1x256xf32>
    %4 = vector.broadcast %3 : vector<1x256xf32> to vector<4x256xf32>
    %5 = arith.subf %1, %4 : vector<4x256xf32>
    %6 = math.exp %5 : vector<4x256xf32>
    %cst_2 = arith.constant dense<0.000000e+00> : vector<256xf32>
    %7 = vector.multi_reduction <add>, %6, %cst_2 [0] : vector<4x256xf32> to vector<256xf32>
    %8 = vector.shape_cast %7 : vector<256xf32> to vector<1x256xf32>
    %9 = tpu.reciprocal %8 : vector<1x256xf32> -> vector<1x256xf32>
    %10 = vector.broadcast %9 : vector<1x256xf32> to vector<4x256xf32>
    %11 = arith.mulf %6, %10 : vector<4x256xf32>
    %c0_3 = arith.constant 0 : index
    %c0_4 = arith.constant 0 : index
    %c0_5 = arith.constant 0 : index
    %12 = vector.load %arg3[%c0_3, %c0_4, %c0_5] : memref<1x1x256xi32, #tpu.memory_space<vmem>>, vector<1x1x256xi32>
    %13 = vector.shape_cast %12 : vector<1x1x256xi32> to vector<1x256xi32>
    %14 = tpu.iota {dimensions = array<i32: 0>} : vector<4x256xi32>
    %15 = vector.broadcast %13 : vector<1x256xi32> to vector<4x256xi32>
    %16 = arith.cmpi eq, %15, %14 : vector<4x256xi32>
    %cst_6 = arith.constant 0.000000e+00 : f32
    %17 = vector.broadcast %cst_6 : f32 to vector<4x256xf32>
    %18 = arith.select %16, %11, %17 : vector<4x256xi1>, vector<4x256xf32>
    %cst_7 = arith.constant dense<0.000000e+00> : vector<4xf32>
    %19 = vector.multi_reduction <add>, %18, %cst_7 [1] : vector<4x256xf32> to vector<4xf32>
    %20 = vector.shape_cast %19 : vector<4xf32> to vector<4x1xf32>
    %21 = arith.extui %16 : vector<4x256xi1> to vector<4x256xi32>
    %22 = arith.sitofp %21 : vector<4x256xi32> to vector<4x256xf32>
    %cst_8 = arith.constant dense<0.000000e+00> : vector<4xf32>
    %23 = vector.multi_reduction <add>, %22, %cst_8 [1] : vector<4x256xf32> to vector<4xf32>
    %24 = vector.shape_cast %23 : vector<4xf32> to vector<4x1xf32>
    %cst_9 = arith.constant dense<0.000000e+00> : vector<4xf32>
    %25 = vector.multi_reduction <add>, %11, %cst_9 [1] : vector<4x256xf32> to vector<4xf32>
    %26 = vector.shape_cast %25 : vector<4xf32> to vector<4x1xf32>
    %c0_10 = arith.constant 0 : index
    %c0_11 = arith.constant 0 : index
    %c0_12 = arith.constant 0 : index
    %c0_13 = arith.constant 0 : index
    %27 = vector.load %arg4[%c0_10, %c0_11, %c0_12, %c0_13] : memref<1x1x4x1xf32, #tpu.memory_space<vmem>>, vector<1x1x4x1xf32>
    %28 = vector.shape_cast %27 : vector<1x1x4x1xf32> to vector<4x1xf32>
    %29 = vector.shape_cast %20 : vector<4x1xf32> to vector<1x1x4x1xf32>
    tpu.vector_store %arg4[%c0_10, %c0_11, %c0_12, %c0_13], %29 {strides = array<i32>} : memref<1x1x4x1xf32, #tpu.memory_space<vmem>>, vector<1x1x4x1xf32>,
    %c0_14 = arith.constant 0 : index
    %c0_15 = arith.constant 0 : index
    %c0_16 = arith.constant 0 : index
    %c0_17 = arith.constant 0 : index
    %30 = vector.load %arg5[%c0_14, %c0_15, %c0_16, %c0_17] : memref<1x1x4x1xf32, #tpu.memory_space<vmem>>, vector<1x1x4x1xf32>
    %31 = vector.shape_cast %30 : vector<1x1x4x1xf32> to vector<4x1xf32>
    %32 = vector.shape_cast %26 : vector<4x1xf32> to vector<1x1x4x1xf32>
    tpu.vector_store %arg5[%c0_14, %c0_15, %c0_16, %c0_17], %32 {strides = array<i32>} : memref<1x1x4x1xf32, #tpu.memory_space<vmem>>, vector<1x1x4x1xf32>,
    %c0_18 = arith.constant 0 : index
    %c0_19 = arith.constant 0 : index
    %c0_20 = arith.constant 0 : index
    %c0_21 = arith.constant 0 : index
    %33 = vector.load %arg6[%c0_18, %c0_19, %c0_20, %c0_21] : memref<1x1x4x1xf32, #tpu.memory_space<vmem>>, vector<1x1x4x1xf32>
    %34 = vector.shape_cast %33 : vector<1x1x4x1xf32> to vector<4x1xf32>
    %35 = vector.shape_cast %24 : vector<4x1xf32> to vector<1x1x4x1xf32>
    tpu.vector_store %arg6[%c0_18, %c0_19, %c0_20, %c0_21], %35 {strides = array<i32>} : memref<1x1x4x1xf32, #tpu.memory_space<vmem>>, vector<1x1x4x1xf32>,
    return
  }
  func.func @transform_0(%arg0: i32, %arg1: i32) -> (i32, i32, i32) {
    %c0_i32 = arith.constant 0 : i32
    %c0_i32_0 = arith.constant 0 : i32
    return %arg0, %c0_i32, %arg1 : i32, i32, i32
  }
  func.func @transform_1(%arg0: i32, %arg1: i32) -> (i32, i32, i32) {
    %c0_i32 = arith.constant 0 : i32
    %c0_i32_0 = arith.constant 0 : i32
    return %arg0, %c0_i32, %arg1 : i32, i32, i32
  }
  func.func @transform_2(%arg0: i32, %arg1: i32) -> (i32, i32, i32, i32) {
    %c0_i32 = arith.constant 0 : i32
    %c0_i32_0 = arith.constant 0 : i32
    %c0_i32_1 = arith.constant 0 : i32
    return %arg0, %arg1, %c0_i32, %c0_i32_0 : i32, i32, i32, i32
  }
  func.func @transform_3(%arg0: i32, %arg1: i32) -> (i32, i32, i32, i32) {
    %c0_i32 = arith.constant 0 : i32
    %c0_i32_0 = arith.constant 0 : i32
    %c0_i32_1 = arith.constant 0 : i32
    return %arg0, %arg1, %c0_i32, %c0_i32_0 : i32, i32, i32, i32
  }
  func.func @transform_4(%arg0: i32, %arg1: i32) -> (i32, i32, i32, i32) {
    %c0_i32 = arith.constant 0 : i32
    %c0_i32_0 = arith.constant 0 : i32
    %c0_i32_1 = arith.constant 0 : i32
    return %arg0, %arg1, %c0_i32, %c0_i32_0 : i32, i32, i32, i32
  }
}

</mosaic_0001>

<llo_original>
// kernel: tpu_custom_call.1
$region0: #{tpu_custom_call.1}
  #allocation0 [shape = 'u32[]', space=smem, size = 0x4, offset = 0x4, fixed_abs, tag = 'smem constant byte address 0x4 - core index']
  #allocation1 [shape = 'u32[144,128]{1,0:T(1,128)}', space=vmem, size = 0x12000, scoped, tag = 'internal scratch']
  %s0 = inlined_call_operand.hbm [shape: f32[2,4,256], index: 0, kind: input, shape index: {}]
  %s1 = inlined_call_operand.hbm [shape: s32[2,1,256], index: 1, kind: input, shape index: {}]
  %s2 = inlined_call_operand.vmem [shape: f32[2,1,4,1], index: 2, kind: output, shape index: {0}]
  %s3 = inlined_call_operand.vmem [shape: f32[2,1,4,1], index: 3, kind: output, shape index: {1}]
  %s4 = inlined_call_operand.vmem [shape: f32[2,1,4,1], index: 4, kind: output, shape index: {2}]
  %5 = xla_tuple %s2, %s3, %s4
  %s6 = sld [smem:[#allocation0]]
  $region65: #{tpu_custom_call.1} parent=0
    _
  %s8 = ssub.s32 1, %s6
  %s9 = scalar_select 0, %s8, %s6
  $region1: #{tpu_custom_call.1} parent=0
    #allocation2 [shape = 'u8[8192]{0}', space=vmem, size = 0x2000, scoped, tag = 'input window, operand 0']
    #allocation3 [shape = 's32[2]{0}', space=sflag, size = 0x8, scoped, tag = 'scoped memory for tpu_custom_call.1']
    #allocation4 [shape = 'u8[2048]{0}', space=vmem, size = 0x800, scoped, tag = 'input window, operand 1']
    #allocation5 [shape = 's32[2]{0}', space=sflag, size = 0x8, scoped, tag = 'scoped memory for tpu_custom_call.1']
    %10 = vsyncpa [#allocation3], 0
    %s11 = scalar_lea.sflag [#allocation3], 1
    %12 = vsyncpa %s11, 0
    %13 = vsyncpa [#allocation5], 0
    %s14 = scalar_lea.sflag [#allocation5], 1
    %15 = vsyncpa %s14, 0
    loop: start=0, step=1, limit=4
    $region2: #{tpu_custom_call.1} parent=1 // loop_pre_header
      _
    $region3: #{tpu_custom_call.1} parent=1 // loop_header
      %s17 = sphi 0, %s21
      %p18 = scmp.ge.s32.totalorder %s17, 4
      %s24 = sphi 0, %s36
      %s25 = sphi 0, %s32
      %s26 = sphi 0, %s24
      %s27 = sphi 0, %s25
      %s28 = sphi 0, %s26
      %s29 = sphi 0, %s27
      %s41 = sphi 0, %s43
      %s44 = sphi 0, %s41
      %s45 = sphi 0, %s44
      %s61 = sphi 0, %s45
      %s69 = sphi 0, %s71
      %s72 = sphi 0, %s69
      %s73 = sphi 0, %s72
      %s89 = sphi 0, %s73
      %s97 = sphi 0, %s99
      %s100 = sphi 0, %s97
      %s101 = sphi 0, %s100
      %s117 = sphi 0, %s101
      %s125 = sphi 0, %s127
      %s128 = sphi 0, %s125
      %s129 = sphi 0, %s128
      %s145 = sphi 0, %s129
      %s153 = sphi 0, %s155
      %s156 = sphi 0, %s153
      %s157 = sphi 0, %s156
      %s173 = sphi 0, %s157
    $region4: #{tpu_custom_call.1} parent=1 // loop_header_branch
      %20 = sbr.rel (%p18) target = $region8
    $region5: #{tpu_custom_call.1} parent=1 // loop_body
      %s22 = ssub.s32 %s17, 1
      %s23 = ssub.s32 %s17, 2
      %s30 = sadd.s32 1, %s25
      %p31 = scmp.ge.s32.totalorder %s30, 1
      %s32 = scalar_select %p31, 0, %s30
      %s33 = sadd.s32 1, %s24
      %s34 = scalar_select %p31, %s33, %s24
      %p35 = scmp.ge.s32.totalorder %s34, 2
      %s36 = scalar_select %p35, 0, %s34
      %s37 = ssub.s32 %s24, %s36
      %s38 = ssub.s32 %s25, %s32
      %s39 = sor.u32 %s37, %s38
      %p40 = scmp.eq.s32.totalorder %s39, 0
      %s42 = sadd.s32 %s41, 1
      %s43 = scalar_select %p40, %s41, %s42
      %p46 = pneg %p40
      %p47 = scmp.eq.s32.totalorder %s17, 1
      %p48 = por %p46, %p47
      %p49 = scmp.ne.s32.totalorder %s41, %s44
      %p50 = scmp.eq.s32.totalorder %s17, 0
      %p51 = por %p49, %p50
      %p52 = scmp.ne.s32.totalorder %s41, %s44
      %p53 = scmp.eq.s32.totalorder %s22, 1
      %p54 = por %p52, %p53
      %p55 = scmp.ne.s32.totalorder %s44, %s45
      %p56 = scmp.eq.s32.totalorder %s22, 0
      %p57 = por %p55, %p56
      %p58 = scmp.ne.s32.totalorder %s44, %s45
      %p59 = scmp.eq.s32.totalorder %s23, 1
      %p60 = por %p58, %p59
      %p62 = scmp.ne.s32.totalorder %s45, %s61
      %p63 = scmp.eq.s32.totalorder %s23, 0
      %p64 = por %p62, %p63
      %s65 = ssub.s32 %s24, %s36
      %s66 = ssub.s32 %s25, %s32
      %s67 = sor.u32 %s65, %s66
      %p68 = scmp.eq.s32.totalorder %s67, 0
      %s70 = sadd.s32 %s69, 1
      %s71 = scalar_select %p68, %s69, %s70
      %p74 = pneg %p68
      %p75 = scmp.eq.s32.totalorder %s17, 1
      %p76 = por %p74, %p75
      %p77 = scmp.ne.s32.totalorder %s69, %s72
      %p78 = scmp.eq.s32.totalorder %s17, 0
      %p79 = por %p77, %p78
      %p80 = scmp.ne.s32.totalorder %s69, %s72
      %p81 = scmp.eq.s32.totalorder %s22, 1
      %p82 = por %p80, %p81
      %p83 = scmp.ne.s32.totalorder %s72, %s73
      %p84 = scmp.eq.s32.totalorder %s22, 0
      %p85 = por %p83, %p84
      %p86 = scmp.ne.s32.totalorder %s72, %s73
      %p87 = scmp.eq.s32.totalorder %s23, 1
      %p88 = por %p86, %p87
      %p90 = scmp.ne.s32.totalorder %s73, %s89
      %p91 = scmp.eq.s32.totalorder %s23, 0
      %p92 = por %p90, %p91
      %s93 = ssub.s32 %s24, %s36
      %s94 = ssub.s32 %s25, %s32
      %s95 = sor.u32 %s93, %s94
      %p96 = scmp.eq.s32.totalorder %s95, 0
      %s98 = sadd.s32 %s97, 1
      %s99 = scalar_select %p96, %s97, %s98
      %p102 = pneg %p96
      %p103 = scmp.eq.s32.totalorder %s17, 1
      %p104 = por %p102, %p103
      %p105 = scmp.ne.s32.totalorder %s97, %s100
      %p106 = scmp.eq.s32.totalorder %s17, 0
      %p107 = por %p105, %p106
      %p108 = scmp.ne.s32.totalorder %s97, %s100
      %p109 = scmp.eq.s32.totalorder %s22, 1
      %p110 = por %p108, %p109
      %p111 = scmp.ne.s32.totalorder %s100, %s101
      %p112 = scmp.eq.s32.totalorder %s22, 0
      %p113 = por %p111, %p112
      %p114 = scmp.ne.s32.totalorder %s100, %s101
      %p115 = scmp.eq.s32.totalorder %s23, 1
      %p116 = por %p114, %p115
      %p118 = scmp.ne.s32.totalorder %s101, %s117
      %p119 = scmp.eq.s32.totalorder %s23, 0
      %p120 = por %p118, %p119
      %s121 = ssub.s32 %s24, %s36
      %s122 = ssub.s32 %s25, %s32
      %s123 = sor.u32 %s121, %s122
      %p124 = scmp.eq.s32.totalorder %s123, 0
      %s126 = sadd.s32 %s125, 1
      %s127 = scalar_select %p124, %s125, %s126
      %p130 = pneg %p124
      %p131 = scmp.eq.s32.totalorder %s17, 1
      %p132 = por %p130, %p131
      %p133 = scmp.ne.s32.totalorder %s125, %s128
      %p134 = scmp.eq.s32.totalorder %s17, 0
      %p135 = por %p133, %p134
      %p136 = scmp.ne.s32.totalorder %s125, %s128
      %p137 = scmp.eq.s32.totalorder %s22, 1
      %p138 = por %p136, %p137
      %p139 = scmp.ne.s32.totalorder %s128, %s129
      %p140 = scmp.eq.s32.totalorder %s22, 0
      %p141 = por %p139, %p140
      %p142 = scmp.ne.s32.totalorder %s128, %s129
      %p143 = scmp.eq.s32.totalorder %s23, 1
      %p144 = por %p142, %p143
      %p146 = scmp.ne.s32.totalorder %s129, %s145
      %p147 = scmp.eq.s32.totalorder %s23, 0
      %p148 = por %p146, %p147
      %s149 = ssub.s32 %s24, %s36
      %s150 = ssub.s32 %s25, %s32
      %s151 = sor.u32 %s149, %s150
      %p152 = scmp.eq.s32.totalorder %s151, 0
      %s154 = sadd.s32 %s153, 1
      %s155 = scalar_select %p152, %s153, %s154
      %p158 = pneg %p152
      %p159 = scmp.eq.s32.totalorder %s17, 1
      %p160 = por %p158, %p159
      %p161 = scmp.ne.s32.totalorder %s153, %s156
      %p162 = scmp.eq.s32.totalorder %s17, 0
      %p163 = por %p161, %p162
      %p164 = scmp.ne.s32.totalorder %s153, %s156
      %p165 = scmp.eq.s32.totalorder %s22, 1
      %p166 = por %p164, %p165
      %p167 = scmp.ne.s32.totalorder %s156, %s157
      %p168 = scmp.eq.s32.totalorder %s22, 0
      %p169 = por %p167, %p168
      %p170 = scmp.ne.s32.totalorder %s156, %s157
      %p171 = scmp.eq.s32.totalorder %s23, 1
      %p172 = por %p170, %p171
      %p174 = scmp.ne.s32.totalorder %s157, %s173
      %p175 = scmp.eq.s32.totalorder %s23, 0
      %p176 = por %p174, %p175
      %p177 = scmp.le.s32.totalorder 1, %s17
      %p178 = scmp.lt.s32.totalorder %s17, 3
      %p179 = pnand %p177, %p178
      %p180 = pneg %p179
      // Predicated region
      $region9: #{tpu_custom_call.1} parent=5 // pred_check
        _
      $region10: #{tpu_custom_call.1} parent=5 // pred_check_branch
        %182 = sbr.rel (%p179) target = $region12
      $region11: #{tpu_custom_call.1} parent=5 // pred_region
        %s183 = ssub.s32 %s17, 1
      $region12: #{tpu_custom_call.1} parent=5 // pred_fallthru
        _
      %p184 = scmp.lt.s32.totalorder %s17, 2
      // Predicated region
      $region13: #{tpu_custom_call.1} parent=5 // pred_check
        %p185 = pneg %p184
      $region14: #{tpu_custom_call.1} parent=5 // pred_check_branch
        %187 = sbr.rel (%p185) target = $region16
      $region15: #{tpu_custom_call.1} parent=5 // pred_region
        // Predicated region
        $region17: #{tpu_custom_call.1} parent=15 // pred_check
          %p188 = pneg %p51
        $region18: #{tpu_custom_call.1} parent=15 // pred_check_branch
          %190 = sbr.rel (%p188) target = $region20
        $region19: #{tpu_custom_call.1} parent=15 // pred_region
          %s191 = sand.u32 %s41, 1
          %s192 = scalar_lea.sflag [#allocation3], %s191
          %s193 = sand.u32 %s41, 1
          %s194 = smul.addr %s193, 8
          %s195 = scalar_lea.vmem [#allocation2], %s194
          %s196 = smul.u32 2, %s25
          %s198 = ssub.s32 128, 128
          %199 = vsyncadd %s192, %s198
          %s200 = smul.addr %s24, 2
          %s201 = sadd.s32 %s196, %s200
          %s202 = smul.addr %s201, 64
          %s203 = scalar_lea.hbm %s0, %s202
          %s205 = sshll.u32 %s195, 4
          %s206 = int_to_ptr.vmem [resolvable:$true] %s205
          %208 = dma.hbm_to_vmem [thread:$0]  %s203, 128, %s206, %s192
        $region20: #{tpu_custom_call.1} parent=15 // pred_fallthru
          _
        // Predicated region
        $region21: #{tpu_custom_call.1} parent=15 // pred_check
          %p209 = pneg %p79
        $region22: #{tpu_custom_call.1} parent=15 // pred_check_branch
          %211 = sbr.rel (%p209) target = $region24
        $region23: #{tpu_custom_call.1} parent=15 // pred_region
          %s212 = sand.u32 %s69, 1
          %s213 = scalar_lea.sflag [#allocation5], %s212
          %s214 = sand.u32 %s69, 1
          %s215 = smul.addr %s214, 2
          %s216 = scalar_lea.vmem [#allocation4], %s215
          %s217 = smul.u32 2, %s25
          %s219 = ssub.s32 32, 32
          %220 = vsyncadd %s213, %s219
          %s221 = smul.addr %s24, 2
          %s222 = sadd.s32 %s217, %s221
          %s223 = smul.addr %s222, 16
          %s224 = scalar_lea.hbm %s1, %s223
          %s226 = sshll.u32 %s216, 4
          %s227 = int_to_ptr.vmem [resolvable:$true] %s226
          %229 = dma.hbm_to_vmem [thread:$0]  %s224, 32, %s227, %s213
        $region24: #{tpu_custom_call.1} parent=15 // pred_fallthru
          _
      $region16: #{tpu_custom_call.1} parent=5 // pred_fallthru
        _
      %p230 = scmp.le.s32.totalorder 1, %s17
      %p231 = scmp.lt.s32.totalorder %s17, 3
      %p232 = pnand %p230, %p231
      %p233 = pneg %p232
      // Predicated region
      $region25: #{tpu_custom_call.1} parent=5 // pred_check
        _
      $region26: #{tpu_custom_call.1} parent=5 // pred_check_branch
        %235 = sbr.rel (%p232) target = $region28
      $region27: #{tpu_custom_call.1} parent=5 // pred_region
        %s236 = ssub.s32 %s17, 1
        %s237 = sand.u32 %s44, 1
        %s238 = scalar_lea.sflag [#allocation3], %s237
        %s239 = sand.u32 %s44, 1
        %s240 = smul.addr %s239, 8
        %s241 = scalar_lea.vmem [#allocation2], %s240
        // Predicated region
        $region29: #{tpu_custom_call.1} parent=27 // pred_check
          %p242 = pneg %p57
        $region30: #{tpu_custom_call.1} parent=27 // pred_check_branch
          %244 = sbr.rel (%p242) target = $region32
        $region31: #{tpu_custom_call.1} parent=27 // pred_region
          %245 = dma.done %s238, 128
        $region32: #{tpu_custom_call.1} parent=27 // pred_fallthru
          _
        %s246 = sand.u32 %s72, 1
        %s247 = scalar_lea.sflag [#allocation5], %s246
        %s248 = sand.u32 %s72, 1
        %s249 = smul.addr %s248, 2
        %s250 = scalar_lea.vmem [#allocation4], %s249
        // Predicated region
        $region33: #{tpu_custom_call.1} parent=27 // pred_check
          %p251 = pneg %p85
        $region34: #{tpu_custom_call.1} parent=27 // pred_check_branch
          %253 = sbr.rel (%p251) target = $region36
        $region35: #{tpu_custom_call.1} parent=27 // pred_region
          %254 = dma.done %s247, 32
        $region36: #{tpu_custom_call.1} parent=27 // pred_fallthru
          _
        %s255 = sand.u32 %s44, 1
        %s256 = scalar_lea.sflag [#allocation3], %s255
        %s257 = sand.u32 %s44, 1
        %s258 = smul.addr %s257, 8
        %s259 = scalar_lea.vmem [#allocation2], %s258
        %p260 = pneg %p57
        %p261 = pneg %p54
        %s262 = sand.u32 %s72, 1
        %s263 = scalar_lea.sflag [#allocation5], %s262
        %s264 = sand.u32 %s72, 1
        %s265 = smul.addr %s264, 2
        %s266 = scalar_lea.vmem [#allocation4], %s265
        %p267 = pneg %p85
        %p268 = pneg %p82
        %p269 = pneg %p113
        %p270 = pneg %p110
        %p271 = scmp.lt.s32.totalorder %s26, 1
        %s272 = scalar_select %p271, %s26, 1
        %p273 = scmp.lt.s32.totalorder %s27, 0
        %s274 = scalar_select %p273, %s27, 0
        %s275 = sadd.s32 %s274, %s272
        %s276 = smul.addr %s275, 4
        %s277 = scalar_lea.vmem %s2, %s276
        %p278 = pneg %p141
        %p279 = pneg %p138
        %p280 = scmp.lt.s32.totalorder %s26, 1
        %s281 = scalar_select %p280, %s26, 1
        %p282 = scmp.lt.s32.totalorder %s27, 0
        %s283 = scalar_select %p282, %s27, 0
        %s284 = sadd.s32 %s283, %s281
        %s285 = smul.addr %s284, 4
        %s286 = scalar_lea.vmem %s3, %s285
        %p287 = pneg %p169
        %p288 = pneg %p166
        %p289 = scmp.lt.s32.totalorder %s26, 1
        %s290 = scalar_select %p289, %s26, 1
        %p291 = scmp.lt.s32.totalorder %s27, 0
        %s292 = scalar_select %p291, %s27, 0
        %s293 = sadd.s32 %s292, %s290
        %s294 = smul.addr %s293, 4
        %s295 = scalar_lea.vmem %s4, %s294
        %s296 = smul.u32 2, %s27
        %s297 = smul.u32 2, %s27
        %p298 = scmp.lt.s32.totalorder %s26, 1
        %s299 = scalar_select %p298, %s26, 1
        %p300 = scmp.lt.s32.totalorder %s27, 0
        %s301 = scalar_select %p300, %s27, 0
        %s302 = sadd.s32 %s301, %s299
        %s303 = smul.addr %s302, 4
        %s304 = scalar_lea.vmem %s2, %s303
        %p305 = scmp.lt.s32.totalorder %s26, 1
        %s306 = scalar_select %p305, %s26, 1
        %p307 = scmp.lt.s32.totalorder %s27, 0
        %s308 = scalar_select %p307, %s27, 0
        %s309 = sadd.s32 %s308, %s306
        %s310 = smul.addr %s309, 4
        %s311 = scalar_lea.vmem %s3, %s310
        %p312 = scmp.lt.s32.totalorder %s26, 1
        %s313 = scalar_select %p312, %s26, 1
        %p314 = scmp.lt.s32.totalorder %s27, 0
        %s315 = scalar_select %p314, %s27, 0
        %s316 = sadd.s32 %s315, %s313
        %s317 = smul.addr %s316, 4
        %s318 = scalar_lea.vmem %s4, %s317
        %v319 = vld [vmem:[%s241] sm:$0xff]
        %v321 = vcombine.high %v319, %v319
        %vm323 = vcmask 1043456
        %v324 = vsel %vm323, %v319, -inf
        %v325 = vrot.slane %v324, 4
        %v326 = vmax.f32 %v324, %v325
        %v327 = vrot.slane %v326, 2
        %v328 = vmax.f32 %v326, %v327
        %v329 = vrot.slane %v328, 1
        %v330 = vmax.f32 %v328, %v329
        %v331 = vsel %vm323, %v321, -inf
        %v332 = vrot.slane %v331, 4
        %v333 = vmax.f32 %v331, %v332
        %v334 = vrot.slane %v333, 2
        %v335 = vmax.f32 %v333, %v334
        %v336 = vrot.slane %v335, 1
        %v337 = vmax.f32 %v335, %v336
        %v340 = vcombine.low %v330, %v337
        %v342 = vsub.f32 %v319, %v340
        %v343 = vmul.f32 %v342, 1.442695
        %v344 = vpow.pop %v343
        %v346 = vcombine.high %v344, %v344
        %v348 = vsel %vm323, %v344, 0.0
        %v349 = vrot.slane %v348, 4
        %v350 = vadd.f32 %v348, %v349
        %v351 = vrot.slane %v350, 2
        %v352 = vadd.f32 %v350, %v351
        %v353 = vrot.slane %v352, 1
        %v354 = vadd.f32 %v352, %v353
        %v355 = vsel %vm323, %v346, 0.0
        %v356 = vrot.slane %v355, 4
        %v357 = vadd.f32 %v355, %v356
        %v358 = vrot.slane %v357, 2
        %v359 = vadd.f32 %v357, %v358
        %v360 = vrot.slane %v359, 1
        %v361 = vadd.f32 %v359, %v360
        %v362 = vrcp.pop %v354
        %v363 = vrcp.pop %v361
        %v366 = vcombine.low %v362, %v363
        %v368 = vmul.f32 %v344, %v366
        %v369 = vld [vmem:[%s250] sm:$0x3]
        %v370 = vlaneseq
        %v371 = vshrl.u32 %v370, 7
        %v372 = vlaneseq
        %v373 = vshrl.u32 %v372, 7
        %v374 = vsub.s32 0, %v373
        %v375 = vrot.slane %v369, %v374
        %v376 = vlaneseq
        %v377 = vshrl.u32 %v376, 7
        %v378 = vsub.s32 1, %v377
        %v379 = vrot.slane %v369, %v378
        %vm380 = vcmp.eq.s32.totalorder %v375, %v371
        %vm381 = vcmp.eq.s32.totalorder %v379, %v371
        %v383 = vcombine.high %v368, %v368
        %v385 = vsel %vm380, %v368, 0.0
        %v386 = vsel %vm381, %v383, 0.0
        %v387 = vsel %vm323, %v385, 0.0
        %v388 = vsel %vm323, %v386, 0.0
        %v389 = vadd.f32 %v387, %v388
        %390 = vadd.xlane.f32.xlu0 %v389
        %v391 = vpop.xlane.xlu0 %390
        %v392 = vsel %vm380, 1, 0
        %v393 = vsel %vm381, 1, 0
        %v394 = vcvt.s32.f32 %v392
        %v395 = vcvt.s32.f32 %v393
        %v396 = vsel %vm323, %v394, 0.0
        %v397 = vsel %vm323, %v395, 0.0
        %v398 = vadd.f32 %v396, %v397
        %399 = vadd.xlane.f32.xlu0 %v398
        %v400 = vpop.xlane.xlu0 %399
        %v401 = vsel %vm323, %v368, 0.0
        %v402 = vsel %vm323, %v383, 0.0
        %v403 = vadd.f32 %v401, %v402
        %404 = vadd.xlane.f32.xlu0 %v403
        %v405 = vpop.xlane.xlu0 %404
        %vm406 = vcmask 3072
        %407 = vst.msk [vmem:[%s304] sm:$0xf] %vm406, %v391
        %408 = vst.msk [vmem:[%s311] sm:$0xf] %vm406, %v405
        %409 = vst.msk [vmem:[%s318] sm:$0xf] %vm406, %v400
        %p410 = scmp.lt.s32.totalorder %s26, 1
        %s411 = scalar_select %p410, %s26, 1
        %p412 = scmp.lt.s32.totalorder %s27, 0
        %s413 = scalar_select %p412, %s27, 0
        %s414 = sadd.s32 %s413, %s411
        %s415 = smul.addr %s414, 4
        %s416 = scalar_lea.vmem %s2, %s415
        %p417 = scmp.lt.s32.totalorder %s26, 1
        %s418 = scalar_select %p417, %s26, 1
        %p419 = scmp.lt.s32.totalorder %s27, 0
        %s420 = scalar_select %p419, %s27, 0
        %s421 = sadd.s32 %s420, %s418
        %s422 = smul.addr %s421, 4
        %s423 = scalar_lea.vmem %s3, %s422
        %p424 = scmp.lt.s32.totalorder %s26, 1
        %s425 = scalar_select %p424, %s26, 1
        %p426 = scmp.lt.s32.totalorder %s27, 0
        %s427 = scalar_select %p426, %s27, 0
        %s428 = sadd.s32 %s427, %s425
        %s429 = smul.addr %s428, 4
        %s430 = scalar_lea.vmem %s4, %s429
        // Predicated region
        $region37: #{tpu_custom_call.1} parent=27 // pred_check
          %p431 = pneg %p110
        $region38: #{tpu_custom_call.1} parent=27 // pred_check_branch
          %433 = sbr.rel (%p431) target = $region40
        $region39: #{tpu_custom_call.1} parent=27 // pred_region
          _
        $region40: #{tpu_custom_call.1} parent=27 // pred_fallthru
          _
        // Predicated region
        $region41: #{tpu_custom_call.1} parent=27 // pred_check
          %p434 = pneg %p138
        $region42: #{tpu_custom_call.1} parent=27 // pred_check_branch
          %436 = sbr.rel (%p434) target = $region44
        $region43: #{tpu_custom_call.1} parent=27 // pred_region
          _
        $region44: #{tpu_custom_call.1} parent=27 // pred_fallthru
          _
        // Predicated region
        $region45: #{tpu_custom_call.1} parent=27 // pred_check
          %p437 = pneg %p166
        $region46: #{tpu_custom_call.1} parent=27 // pred_check_branch
          %439 = sbr.rel (%p437) target = $region48
        $region47: #{tpu_custom_call.1} parent=27 // pred_region
          _
        $region48: #{tpu_custom_call.1} parent=27 // pred_fallthru
          _
      $region28: #{tpu_custom_call.1} parent=5 // pred_fallthru
        _
      %p440 = scmp.le.s32.totalorder 2, %s17
      // Predicated region
      $region49: #{tpu_custom_call.1} parent=5 // pred_check
        %p441 = pneg %p440
      $region50: #{tpu_custom_call.1} parent=5 // pred_check_branch
        %443 = sbr.rel (%p441) target = $region52
      $region51: #{tpu_custom_call.1} parent=5 // pred_region
        %s444 = ssub.s32 %s17, 2
        // Predicated region
        $region53: #{tpu_custom_call.1} parent=51 // pred_check
          %p445 = pneg %p116
        $region54: #{tpu_custom_call.1} parent=51 // pred_check_branch
          %447 = sbr.rel (%p445) target = $region56
        $region55: #{tpu_custom_call.1} parent=51 // pred_region
          %p448 = scmp.lt.s32.totalorder %s28, 1
          %s449 = scalar_select %p448, %s28, 1
          %p450 = scmp.lt.s32.totalorder %s29, 0
          %s451 = scalar_select %p450, %s29, 0
          %s452 = sadd.s32 %s451, %s449
          %s453 = smul.addr %s452, 4
          %s454 = scalar_lea.vmem %s2, %s453
        $region56: #{tpu_custom_call.1} parent=51 // pred_fallthru
          _
        // Predicated region
        $region57: #{tpu_custom_call.1} parent=51 // pred_check
          %p455 = pneg %p144
        $region58: #{tpu_custom_call.1} parent=51 // pred_check_branch
          %457 = sbr.rel (%p455) target = $region60
        $region59: #{tpu_custom_call.1} parent=51 // pred_region
          %p458 = scmp.lt.s32.totalorder %s28, 1
          %s459 = scalar_select %p458, %s28, 1
          %p460 = scmp.lt.s32.totalorder %s29, 0
          %s461 = scalar_select %p460, %s29, 0
          %s462 = sadd.s32 %s461, %s459
          %s463 = smul.addr %s462, 4
          %s464 = scalar_lea.vmem %s3, %s463
        $region60: #{tpu_custom_call.1} parent=51 // pred_fallthru
          _
        // Predicated region
        $region61: #{tpu_custom_call.1} parent=51 // pred_check
          %p465 = pneg %p172
        $region62: #{tpu_custom_call.1} parent=51 // pred_check_branch
          %467 = sbr.rel (%p465) target = $region64
        $region63: #{tpu_custom_call.1} parent=51 // pred_region
          %p468 = scmp.lt.s32.totalorder %s28, 1
          %s469 = scalar_select %p468, %s28, 1
          %p470 = scmp.lt.s32.totalorder %s29, 0
          %s471 = scalar_select %p470, %s29, 0
          %s472 = sadd.s32 %s471, %s469
          %s473 = smul.addr %s472, 4
          %s474 = scalar_lea.vmem %s4, %s473
        $region64: #{tpu_custom_call.1} parent=51 // pred_fallthru
          _
      $region52: #{tpu_custom_call.1} parent=5 // pred_fallthru
        _
    $region6: #{tpu_custom_call.1} parent=1 // loop_footer
      %s21 = sadd.s32 1, %s17
    $region7: #{tpu_custom_call.1} parent=1 // loop_footer_branch
      %16 = sbr.rel target = $region3
    $region8: #{tpu_custom_call.1} parent=1 // loop_exit
      _
    %475 = vsyncpa [#allocation3], 1
    %s476 = scalar_lea.sflag [#allocation3], 1
    %477 = vsyncpa %s476, 1
    %478 = vsyncpa [#allocation5], 1
    %s479 = scalar_lea.sflag [#allocation5], 1
    %480 = vsyncpa %s479, 1

</llo_original>
